<compile_context>
chip_gen: v6e
topology: v6e:2x2x1
jax: 0.10.0
libtpu: 0.0.40
codegen_flags: <defaults>
</compile_context>

<pallas_src>
import jax
import jax.numpy as jnp
import numpy as np
from jax.experimental import pallas as pl
from jax.experimental.pallas import tpu as pltpu

LANE = 128


def _round_up(x, m):
    return (x + m - 1) // m * m


# ----------------------------------------------------------------------------
# Fused MLP kernel: [x @ Wi + bi -> ReLU]* -> x @ Wout + bout -> log_softmax
# ----------------------------------------------------------------------------
def _make_network_kernel(num_hidden):
    def kernel(x_ref, *refs):
        # refs = [w0, b0, w1, b1, ..., w_out, b_out, o_ref]
        o_ref = refs[-1]
        h = x_ref[...]                              # (bm, D), bf16 (or f32)
        for i in range(num_hidden):
            w = refs[2 * i][...]                    # (in, out_pad), weight dtype
            b = refs[2 * i + 1][...]                # (1, out_pad), f32
            y = jnp.dot(h.astype(w.dtype), w,
                        preferred_element_type=jnp.float32) + b
            h = jnp.maximum(y, 0.0)                 # ReLU in f32
            # dropout: identity (eval mode) -- see TODO(synk) at file top.
        w_o = refs[2 * num_hidden][...]
        b_o = refs[2 * num_hidden + 1][...]
        logits = jnp.dot(h.astype(w_o.dtype), w_o,
                         preferred_element_type=jnp.float32) + b_o
        # numerically-stable log_softmax along the last (lane) axis.
        m = jnp.max(logits, axis=-1, keepdims=True)
        s = logits - m
        lse = jnp.log(jnp.sum(jnp.exp(s), axis=-1, keepdims=True))
        o_ref[...] = (s - lse).astype(o_ref.dtype)

    return kernel


# ----------------------------------------------------------------------------
# Deployment-time weight preparation
# ----------------------------------------------------------------------------
def prepare_params(params, *, weight_dtype=jnp.bfloat16, lane=LANE):
    """Pad hidden widths to multiples of `lane` and cast weights to bf16.

    * W is stored as (in_features, out_features) so y = x @ W + b matches
      PyTorch's x @ W.T + b.
    * Hidden widths are zero-padded so every intermediate activation is a
      full 128-lane vreg; the padded lanes carry exact zeros through ReLU and
      are killed by the zero rows of the next layer's W, so the math is
      unchanged.  The input feature dim and the final output width are NOT
      padded (the output write stays lane-narrow but tiny).
    * Biases stay in f32 (added after the f32-accumulating dot).
    """
    n = len(params)
    prepared = []
    in_dim = params[0][0].shape[0]
    for idx, (w, b) in enumerate(params):
        fan_in, fan_out = w.shape
        out_dim = fan_out if idx == n - 1 else _round_up(fan_out, lane)
        w_p = jnp.zeros((in_dim, out_dim), weight_dtype)
        w_p = w_p.at[:fan_in, :fan_out].set(w.astype(weight_dtype))
        b_p = jnp.zeros((1, out_dim), jnp.float32)
        b_p = b_p.at[0, :fan_out].set(b.astype(jnp.float32))
        prepared.append((w_p, b_p))
        in_dim = out_dim
    return prepared


def _choose_batch_tile(n_rows):
    if n_rows >= 1024:
        # Large-N regime: 512-row tiles (~85% of HBM roofline in measured
        # Pallas sweeps vs ~29% at 128); still only ~0.5 MiB per activation
        # tile at these widths, safe on v5e/v6e/v7x.
        return 512
    if n_rows >= 16:
        # Mid N: at least 2 grid steps so both of v7x's TensorCores get work
        # under the "parallel" batch axis (no-op on 1-TC v5e/v6e).
        return min(512, _round_up(pl.cdiv(n_rows, 2), 16))
    # Tiny N (demo shapes): single step; pure launch/DMA overhead anyway.
    return n_rows


# ----------------------------------------------------------------------------
# Host wrapper
# ----------------------------------------------------------------------------
def network_forward(x, prepared_params):
    """x: (N, input_size) f32.  prepared_params: output of prepare_params().
    Returns f32 log-probabilities of shape (N, output_size)."""
    N, D = x.shape
    num_hidden = len(prepared_params) - 1
    out_dim = prepared_params[-1][0].shape[1]
    w_dtype = prepared_params[0][0].dtype

    # Feed the activation stream in the weight dtype (bf16): halves the
    # dominant HBM read.  All dots accumulate in f32 inside the kernel.
    x_in = x.astype(w_dtype)

    bm = _choose_batch_tile(N)
    grid = (pl.cdiv(N, bm),)

    in_specs = [pl.BlockSpec((bm, D), lambda i: (i, 0))]
    flat_args = [x_in]
    for w, b in prepared_params:
        # Whole-array, constant-index blocks: fetched once, kept VMEM-resident.
        in_specs.append(pl.BlockSpec(w.shape, lambda i: (0, 0)))
        in_specs.append(pl.BlockSpec(b.shape, lambda i: (0, 0)))
        flat_args.append(w)
        flat_args.append(b)

    # Advisory cost estimate so XLA's scheduler overlaps this call correctly.
    flops = 2 * N * sum(int(w.shape[0]) * int(w.shape[1])
                        for w, _ in prepared_params)
    weight_bytes = sum(w.size * w.dtype.itemsize + b.size * b.dtype.itemsize
                       for w, b in prepared_params)
    bytes_accessed = (x_in.size * x_in.dtype.itemsize
                      + N * out_dim * 4 + weight_bytes)
    cost = pl.CostEstimate(flops=flops, transcendentals=N * out_dim,
                           bytes_accessed=bytes_accessed)

    # Explicit per-step VMEM budget: double-buffered x/out tiles + resident
    # (default double-buffered) weights + the widest intermediate activation.
    # Only request a larger scoped limit when the default would be tight;
    # cap well under v7x's 64 MiB physical VMEM.
    widest = max(int(w.shape[1]) for w, _ in prepared_params)
    vmem_est = (2 * bm * D * x_in.dtype.itemsize      # x tile (double-buffered)
                + 2 * bm * out_dim * 4                # out tile (double-buffered)
                + 2 * bm * widest * 4                 # intermediate activations
                + 2 * weight_bytes)                   # weights/biases (x2 bufs)
    compiler_kwargs = dict(dimension_semantics=("parallel",))
    if vmem_est > 8 * 1024 * 1024:
        compiler_kwargs["vmem_limit_bytes"] = min(int(vmem_est * 1.5),
                                                  48 * 1024 * 1024)

    return pl.pallas_call(
        _make_network_kernel(num_hidden),
        out_shape=jax.ShapeDtypeStruct((N, out_dim), jnp.float32),
        grid=grid,
        in_specs=in_specs,
        out_specs=pl.BlockSpec((bm, out_dim), lambda i: (i, 0)),
        compiler_params=pltpu.CompilerParams(**compiler_kwargs),
        cost_estimate=cost,
    )(*flat_args)


# ----------------------------------------------------------------------------
# Parameter init (matches PyTorch nn.Linear default: U(-1/sqrt(fan_in), ...))
# ----------------------------------------------------------------------------
def init_network_params(key, input_size, output_size, hidden_layers):
    sizes = [input_size] + list(hidden_layers) + [output_size]
    params = []
    for fan_in, fan_out in zip(sizes[:-1], sizes[1:]):
        key, kw, kb = jax.random.split(key, 3)
        bound = 1.0 / np.sqrt(fan_in)
        w = jax.random.uniform(kw, (fan_in, fan_out), jnp.float32, -bound, bound)
        b = jax.random.uniform(kb, (fan_out,), jnp.float32, -bound, bound)
        params.append((w, b))
    return params


def network_reference(x, prepared_params):
    """Pure-JAX reference (no Pallas) implementing the same padded/bf16 math
    as the kernel, for correctness checking (eval-mode dropout)."""
    hp = jax.lax.Precision.HIGHEST
    w_dtype = prepared_params[0][0].dtype
    h = x.astype(w_dtype).astype(jnp.float32)
    for w, b in prepared_params[:-1]:
        y = jnp.dot(h.astype(w.dtype).astype(jnp.float32),
                    w.astype(jnp.float32), precision=hp) + b
        h = jnp.maximum(y, 0.0)
    w, b = prepared_params[-1]
    logits = jnp.dot(h.astype(w.dtype).astype(jnp.float32),
                     w.astype(jnp.float32), precision=hp) + b
    return jax.nn.log_softmax(logits, axis=1)


if __name__ == "__main__":
    key = jax.random.PRNGKey(0)
    batch = 2
    input_size = 32
    hidden_layers = [64, 32]
    output_size = 10

    pkey, xkey = jax.random.split(key)
    raw_params = init_network_params(pkey, input_size, output_size,
                                     hidden_layers)
    params = prepare_params(raw_params)      # bf16 weights, 128-lane padding
    x = jax.random.normal(xkey, (batch, input_size), jnp.float32)

    out = jax.block_until_ready(network_forward(x, params))
    ref = jax.block_until_ready(network_reference(x, params))

    assert out.shape == (batch, output_size), out.shape
    np.testing.assert_allclose(np.asarray(out), np.asarray(ref),
                               rtol=2e-2, atol=2e-2)
    # log_softmax rows must sum to 1 in probability space.
    np.testing.assert_allclose(np.exp(np.asarray(out)).sum(axis=1),
                               np.ones(batch), rtol=1e-3, atol=1e-3)
    print("KERNEL_OK")
</pallas_src>

<mosaic_0001>
module attributes {stable_mosaic.version = 11 : i64} {
  func.func @kernel(%arg0: i32, %arg1: memref<2x32xbf16, #tpu.memory_space<vmem>>, %arg2: memref<32x128xbf16, #tpu.memory_space<vmem>>, %arg3: memref<1x128xf32, #tpu.memory_space<vmem>>, %arg4: memref<128x128xbf16, #tpu.memory_space<vmem>>, %arg5: memref<1x128xf32, #tpu.memory_space<vmem>>, %arg6: memref<128x10xbf16, #tpu.memory_space<vmem>>, %arg7: memref<1x10xf32, #tpu.memory_space<vmem>>, %arg8: memref<2x10xf32, #tpu.memory_space<vmem>>) attributes {dimension_semantics = [#tpu.dimension_semantics<parallel>], iteration_bounds = array<i64: 1>, scalar_prefetch = 0 : i64, scratch_operands = 0 : i64, tpu.core_type = #tpu.core_type<tc>, window_params = [{transform_indices = @transform_0, window_bounds = array<i64: 2, 32>}, {pipeline_mode = #tpu.pipeline_mode<synchronous>, transform_indices = @transform_1, window_bounds = array<i64: 32, 128>}, {pipeline_mode = #tpu.pipeline_mode<synchronous>, transform_indices = @transform_2, window_bounds = array<i64: 1, 128>}, {pipeline_mode = #tpu.pipeline_mode<synchronous>, transform_indices = @transform_3, window_bounds = array<i64: 128, 128>}, {pipeline_mode = #tpu.pipeline_mode<synchronous>, transform_indices = @transform_4, window_bounds = array<i64: 1, 128>}, {pipeline_mode = #tpu.pipeline_mode<synchronous>, transform_indices = @transform_5, window_bounds = array<i64: 128, 10>}, {pipeline_mode = #tpu.pipeline_mode<synchronous>, transform_indices = @transform_6, window_bounds = array<i64: 1, 10>}, {transform_indices = @transform_7, window_bounds = array<i64: 2, 10>}]} {
    %c0 = arith.constant 0 : index
    %c0_0 = arith.constant 0 : index
    %0 = vector.load %arg1[%c0, %c0_0] : memref<2x32xbf16, #tpu.memory_space<vmem>>, vector<2x32xbf16>
    %c0_1 = arith.constant 0 : index
    %c0_2 = arith.constant 0 : index
    %1 = vector.load %arg2[%c0_1, %c0_2] : memref<32x128xbf16, #tpu.memory_space<vmem>>, vector<32x128xbf16>
    %c0_3 = arith.constant 0 : index
    %c0_4 = arith.constant 0 : index
    %2 = vector.load %arg3[%c0_3, %c0_4] : memref<1x128xf32, #tpu.memory_space<vmem>>, vector<1x128xf32>
    %cst = arith.constant dense<0.000000e+00> : vector<2x128xf32>
    %3 = tpu.matmul %0, %1, %cst {dimension_numbers = #tpu.dot_dimension_numbers<[1], [0], [0], [1], [0, 0, 1, 1], [], []>} : vector<2x32xbf16>, vector<32x128xbf16>, vector<2x128xf32> -> vector<2x128xf32>
    %4 = vector.broadcast %2 : vector<1x128xf32> to vector<2x128xf32>
    %5 = arith.addf %3, %4 : vector<2x128xf32>
    %cst_5 = arith.constant 0.000000e+00 : f32
    %6 = vector.broadcast %cst_5 : f32 to vector<2x128xf32>
    %7 = arith.maximumf %5, %6 : vector<2x128xf32>
    %c0_6 = arith.constant 0 : index
    %c0_7 = arith.constant 0 : index
    %8 = vector.load %arg4[%c0_6, %c0_7] : memref<128x128xbf16, #tpu.memory_space<vmem>>, vector<128x128xbf16>
    %c0_8 = arith.constant 0 : index
    %c0_9 = arith.constant 0 : index
    %9 = vector.load %arg5[%c0_8, %c0_9] : memref<1x128xf32, #tpu.memory_space<vmem>>, vector<1x128xf32>
    %10 = arith.truncf %7 : vector<2x128xf32> to vector<2x128xbf16>
    %cst_10 = arith.constant dense<0.000000e+00> : vector<2x128xf32>
    %11 = tpu.matmul %10, %8, %cst_10 {dimension_numbers = #tpu.dot_dimension_numbers<[1], [0], [0], [1], [0, 0, 1, 1], [], []>} : vector<2x128xbf16>, vector<128x128xbf16>, vector<2x128xf32> -> vector<2x128xf32>
    %12 = vector.broadcast %9 : vector<1x128xf32> to vector<2x128xf32>
    %13 = arith.addf %11, %12 : vector<2x128xf32>
    %cst_11 = arith.constant 0.000000e+00 : f32
    %14 = vector.broadcast %cst_11 : f32 to vector<2x128xf32>
    %15 = arith.maximumf %13, %14 : vector<2x128xf32>
    %c0_12 = arith.constant 0 : index
    %c0_13 = arith.constant 0 : index
    %16 = vector.load %arg6[%c0_12, %c0_13] : memref<128x10xbf16, #tpu.memory_space<vmem>>, vector<128x10xbf16>
    %c0_14 = arith.constant 0 : index
    %c0_15 = arith.constant 0 : index
    %17 = vector.load %arg7[%c0_14, %c0_15] : memref<1x10xf32, #tpu.memory_space<vmem>>, vector<1x10xf32>
    %18 = arith.truncf %15 : vector<2x128xf32> to vector<2x128xbf16>
    %cst_16 = arith.constant dense<0.000000e+00> : vector<2x10xf32>
    %19 = tpu.matmul %18, %16, %cst_16 {dimension_numbers = #tpu.dot_dimension_numbers<[1], [0], [0], [1], [0, 0, 1, 1], [], []>} : vector<2x128xbf16>, vector<128x10xbf16>, vector<2x10xf32> -> vector<2x10xf32>
    %20 = vector.broadcast %17 : vector<1x10xf32> to vector<2x10xf32>
    %21 = arith.addf %19, %20 : vector<2x10xf32>
    %cst_17 = arith.constant dense<0xFF800000> : vector<2xf32>
    %22 = vector.multi_reduction <maximumf>, %21, %cst_17 [1] : vector<2x10xf32> to vector<2xf32>
    %23 = vector.shape_cast %22 : vector<2xf32> to vector<2x1xf32>
    %24 = vector.broadcast %23 : vector<2x1xf32> to vector<2x10xf32>
    %25 = arith.subf %21, %24 : vector<2x10xf32>
    %26 = math.exp %25 : vector<2x10xf32>
    %cst_18 = arith.constant dense<0.000000e+00> : vector<2xf32>
    %27 = vector.multi_reduction <add>, %26, %cst_18 [1] : vector<2x10xf32> to vector<2xf32>
    %28 = vector.shape_cast %27 : vector<2xf32> to vector<2x1xf32>
    %29 = math.log %28 : vector<2x1xf32>
    %30 = vector.broadcast %29 : vector<2x1xf32> to vector<2x10xf32>
    %31 = arith.subf %25, %30 : vector<2x10xf32>
    %c0_19 = arith.constant 0 : index
    %c0_20 = arith.constant 0 : index
    %32 = vector.load %arg8[%c0_19, %c0_20] : memref<2x10xf32, #tpu.memory_space<vmem>>, vector<2x10xf32>
    tpu.vector_store %arg8[%c0_19, %c0_20], %31 {strides = array<i32>} : memref<2x10xf32, #tpu.memory_space<vmem>>, vector<2x10xf32>,
    return
  }
  func.func @transform_0(%arg0: i32) -> (i32, i32) {
    %c0_i32 = arith.constant 0 : i32
    %c0_i32_0 = arith.constant 0 : i32
    return %arg0, %c0_i32 : i32, i32
  }
  func.func @transform_1(%arg0: i32) -> (i32, i32) {
    %c0_i32 = arith.constant 0 : i32
    %c0_i32_0 = arith.constant 0 : i32
    %c0_i32_1 = arith.constant 0 : i32
    return %c0_i32, %c0_i32_0 : i32, i32
  }
  func.func @transform_2(%arg0: i32) -> (i32, i32) {
    %c0_i32 = arith.constant 0 : i32
    %c0_i32_0 = arith.constant 0 : i32
    %c0_i32_1 = arith.constant 0 : i32
    return %c0_i32, %c0_i32_0 : i32, i32
  }
  func.func @transform_3(%arg0: i32) -> (i32, i32) {
    %c0_i32 = arith.constant 0 : i32
    %c0_i32_0 = arith.constant 0 : i32
    %c0_i32_1 = arith.constant 0 : i32
    return %c0_i32, %c0_i32_0 : i32, i32
  }
  func.func @transform_4(%arg0: i32) -> (i32, i32) {
    %c0_i32 = arith.constant 0 : i32
    %c0_i32_0 = arith.constant 0 : i32
    %c0_i32_1 = arith.constant 0 : i32
    return %c0_i32, %c0_i32_0 : i32, i32
  }
  func.func @transform_5(%arg0: i32) -> (i32, i32) {
    %c0_i32 = arith.constant 0 : i32
    %c0_i32_0 = arith.constant 0 : i32
    %c0_i32_1 = arith.constant 0 : i32
    return %c0_i32, %c0_i32_0 : i32, i32
  }
  func.func @transform_6(%arg0: i32) -> (i32, i32) {
    %c0_i32 = arith.constant 0 : i32
    %c0_i32_0 = arith.constant 0 : i32
    %c0_i32_1 = arith.constant 0 : i32
    return %c0_i32, %c0_i32_0 : i32, i32
  }
  func.func @transform_7(%arg0: i32) -> (i32, i32) {
    %c0_i32 = arith.constant 0 : i32
    %c0_i32_0 = arith.constant 0 : i32
    return %arg0, %c0_i32 : i32, i32
  }
}

</mosaic_0001>

<llo_original>
// kernel: tpu_custom_call.1
$region0: #{tpu_custom_call.1}
  #allocation0 [shape = 'u32[]', space=smem, size = 0x4, offset = 0x4, fixed_abs, tag = 'smem constant byte address 0x4 - core index']
  #allocation1 [shape = 'u32[144,128]{1,0:T(1,128)}', space=vmem, size = 0x12000, scoped, tag = 'internal scratch']
  %s0 = inlined_call_operand.vmem [shape: bf16[2,32], index: 0, kind: input, shape index: {}]
  %s1 = inlined_call_operand.hbm [shape: bf16[32,128], index: 1, kind: input, shape index: {}]
  %s2 = inlined_call_operand.vmem [shape: f32[1,128], index: 2, kind: input, shape index: {}]
  %s3 = inlined_call_operand.vmem [shape: bf16[128,128], index: 3, kind: input, shape index: {}]
  %s4 = inlined_call_operand.vmem [shape: f32[1,128], index: 4, kind: input, shape index: {}]
  %s5 = inlined_call_operand.vmem [shape: bf16[128,10], index: 5, kind: input, shape index: {}]
  %s6 = inlined_call_operand.vmem [shape: f32[1,10], index: 6, kind: input, shape index: {}]
  %s7 = inlined_call_operand.hbm [shape: f32[2,10], index: 7, kind: output, shape index: {}]
  %s8 = sld [smem:[#allocation0]]
  $region42: #{tpu_custom_call.1} parent=0
    _
  %s10 = ssub.s32 1, %s8
  %s11 = scalar_select 0, %s10, %s8
  $region1: #{tpu_custom_call.1} parent=0
    #allocation2 [shape = 'u8[8192]{0}', space=vmem, size = 0x2000, scoped, tag = 'input window, operand 1, single buffered']
    #allocation3 [shape = 's32[1]{0}', space=sflag, size = 0x4, scoped, tag = 'scoped memory for tpu_custom_call.1']
    #allocation4 [shape = 's32[1]{0}', space=sflag, size = 0x4, scoped, tag = 'scoped memory for tpu_custom_call.1']
    #allocation5 [shape = 'u8[1024]{0}', space=vmem, size = 0x400, scoped, tag = 'output window, operand 0, single buffered']
    %12 = vsyncpa [#allocation3], 0
    %13 = vsyncpa [#allocation4], 0
    // Predicated region
    $region2: #{tpu_custom_call.1} parent=1 // pred_check
      _
    $region3: #{tpu_custom_call.1} parent=1 // pred_check_branch
      %15 = sbr.rel (0) target = $region5
    $region4: #{tpu_custom_call.1} parent=1 // pred_region
      _
    $region5: #{tpu_custom_call.1} parent=1 // pred_fallthru
      _
    // Predicated region
    $region6: #{tpu_custom_call.1} parent=1 // pred_check
      _
    $region7: #{tpu_custom_call.1} parent=1 // pred_check_branch
      %17 = sbr.rel (0) target = $region9
    $region8: #{tpu_custom_call.1} parent=1 // pred_region
      %s19 = ssub.s32 256, 256
      %20 = vsyncadd [#allocation3], %s19
      %s21 = sshll.u32 [#allocation2], 4
      %s22 = int_to_ptr.vmem [resolvable:$true] %s21
      %27 = dma.hbm_to_vmem [thread:$0]  %s1, 256, %s22, [#allocation3], 64, 64, 4
    $region9: #{tpu_custom_call.1} parent=1 // pred_fallthru
      _
    // Predicated region
    $region10: #{tpu_custom_call.1} parent=1 // pred_check
      _
    $region11: #{tpu_custom_call.1} parent=1 // pred_check_branch
      %29 = sbr.rel (0) target = $region13
    $region12: #{tpu_custom_call.1} parent=1 // pred_region
      _
    $region13: #{tpu_custom_call.1} parent=1 // pred_fallthru
      _
    // Predicated region
    $region14: #{tpu_custom_call.1} parent=1 // pred_check
      _
    $region15: #{tpu_custom_call.1} parent=1 // pred_check_branch
      %31 = sbr.rel (0) target = $region17
    $region16: #{tpu_custom_call.1} parent=1 // pred_region
      _
    $region17: #{tpu_custom_call.1} parent=1 // pred_fallthru
      _
    // Predicated region
    $region18: #{tpu_custom_call.1} parent=1 // pred_check
      _
    $region19: #{tpu_custom_call.1} parent=1 // pred_check_branch
      %33 = sbr.rel (0) target = $region21
    $region20: #{tpu_custom_call.1} parent=1 // pred_region
      _
    $region21: #{tpu_custom_call.1} parent=1 // pred_fallthru
      _
    // Predicated region
    $region22: #{tpu_custom_call.1} parent=1 // pred_check
      _
    $region23: #{tpu_custom_call.1} parent=1 // pred_check_branch
      %35 = sbr.rel (0) target = $region25
    $region24: #{tpu_custom_call.1} parent=1 // pred_region
      _
    $region25: #{tpu_custom_call.1} parent=1 // pred_fallthru
      _
    // Predicated region
    $region26: #{tpu_custom_call.1} parent=1 // pred_check
      _
    $region27: #{tpu_custom_call.1} parent=1 // pred_check_branch
      %37 = sbr.rel (0) target = $region29
    $region28: #{tpu_custom_call.1} parent=1 // pred_region
      _
    $region29: #{tpu_custom_call.1} parent=1 // pred_fallthru
      _
    // Predicated region
    $region30: #{tpu_custom_call.1} parent=1 // pred_check
      _
    $region31: #{tpu_custom_call.1} parent=1 // pred_check_branch
      %39 = sbr.rel (0) target = $region33
    $region32: #{tpu_custom_call.1} parent=1 // pred_region
      %40 = dma.done [#allocation3], 256
    $region33: #{tpu_custom_call.1} parent=1 // pred_fallthru
      _
    %v42 = vld [vmem:[%s0] sm:$0x1]
    %v43 = vld [vmem:[#allocation2] sm:$0xf]
    %v44 = vld [vmem:[#allocation2 + $0x4] sm:$0xf]
    %v45 = vld [vmem:[#allocation2 + $0x8] sm:$0xf]
    %v46 = vld [vmem:[#allocation2 + $0xc] sm:$0xf]
    %v47 = vld [vmem:[%s2] sm:$0x1]
    %v49 = vlaneseq
    %v50 = vshrl.u32 %v49, 7
    %v51 = vsub.s32 0, %v50
    %v52 = vrot.slane %v47, %v51
    %v58 = vunpack.c.l.b16 %v43
    %v59 = vunpack.c.l.b16 %v44
    %v60 = vunpack.c.l.b16 %v45
    %v61 = vunpack.c.l.b16 %v46
    %v62 = vpack.c.b16 %v59, %v58
    %v63 = vpack.c.b16 %v61, %v60
    %vm66 = vcmask 261120
    %v68 = vsel %vm66, %v42, 0
    %70 = vmatprep.subr.bf16.mxu0 0
    %71 = vmatpush1.bf16.msra.mxu0 0
    %72 = vmatprep.subr.bf16.mxu0 0
    %73 = vmatpush1.bf16.msra.mxu0 0
    %74 = vmatprep.subr.bf16.mxu0 0
    %75 = vmatpush1.bf16.msra.mxu0 0
    %76 = vmatprep.subr.bf16.mxu0 0
    %77 = vmatpush1.bf16.msra.mxu0 0
    %78 = vmatprep.subr.bf16.mxu0 0
    %79 = vmatpush1.bf16.msra.mxu0 0
    %80 = vmatprep.subr.bf16.mxu0 0
    %81 = vmatpush1.bf16.msra.mxu0 0
    %82 = vmatprep.subr.bf16.mxu0 0
    %83 = vmatpush1.bf16.msra.mxu0 %v63
    %84 = vmatprep.subr.bf16.mxu0 0
    %85 = vmatpush1.bf16.msra.mxu0 %v62
    %86 = vmatprep.subr.bf16.mxu0 0
    %87 = vmatpush2.bf16.msra.mxu0 0
    %88 = vmatprep.subr.bf16.mxu0 0
    %89 = vmatpush2.bf16.msra.mxu0 0
    %90 = vmatprep.subr.bf16.mxu0 0
    %91 = vmatpush2.bf16.msra.mxu0 0
    %92 = vmatprep.subr.bf16.mxu0 0
    %93 = vmatpush2.bf16.msra.mxu0 0
    %94 = vmatprep.subr.bf16.mxu0 0
    %95 = vmatpush2.bf16.msra.mxu0 0
    %96 = vmatprep.subr.bf16.mxu0 0
    %97 = vmatpush2.bf16.msra.mxu0 0
    %98 = vmatprep.subr.bf16.mxu0 0
    %99 = vmatpush2.bf16.msra.mxu0 0
    %100 = vmatprep.subr.bf16.mxu0 0
    %101 = vmatpush2.bf16.msra.mxu0 0
    %102 = vmatprep.mubr.bf16.mxu0 0
    %103 = vmatmul.mubr.bf16.gmra.mxu0 %v68
    %v104 = vpop.f32.mrf.mxu0
    %v105 = vadd.f32 %v52, %v104
    %v106 = vpop.f32.mrf.mxu0
    %v107 = vpop.f32.mrf.mxu0
    %v108 = vpop.f32.mrf.mxu0
    %109 = vdwg.mxu0
    %v110 = vmax.f32 %v105, 0.0
    %v111 = vld [vmem:[%s3] sm:$0xf]
    %v112 = vld [vmem:[%s3 + $0x4] sm:$0xf]
    %v113 = vld [vmem:[%s3 + $0x8] sm:$0xf]
    %v114 = vld [vmem:[%s3 + $0xc] sm:$0xf]
    %v115 = vld [vmem:[%s3 + $0x10] sm:$0xf]
    %v116 = vld [vmem:[%s3 + $0x14] sm:$0xf]
    %v117 = vld [vmem:[%s3 + $0x18] sm:$0xf]
    %v118 = vld [vmem:[%s3 + $0x1c] sm:$0xf]
    %v119 = vld [vmem:[%s3 + $0x20] sm:$0xf]
    %v120 = vld [vmem:[%s3 + $0x24] sm:$0xf]
    %v121 = vld [vmem:[%s3 + $0x28] sm:$0xf]
    %v122 = vld [vmem:[%s3 + $0x2c] sm:$0xf]
    %v123 = vld [vmem:[%s3 + $0x30] sm:$0xf]
    %v124 = vld [vmem:[%s3 + $0x34] sm:$0xf]
    %v125 = vld [vmem:[%s3 + $0x38] sm:$0xf]
    %v126 = vld [vmem:[%s3 + $0x3c] sm:$0xf]
    %v127 = vld [vmem:[%s4] sm:$0x1]
    %v128 = vpack.c.bf16 %v110, %v110
    %v130 = vlaneseq
    %v131 = vshrl.u32 %v130, 7
    %v132 = vsub.s32 0, %v131
    %v133 = vrot.slane %v127, %v132
    %v151 = vunpack.c.l.b16 %v111
    %v152 = vunpack.c.l.b16 %v112
    %v153 = vunpack.c.l.b16 %v113
    %v154 = vunpack.c.l.b16 %v114
    %v155 = vunpack.c.l.b16 %v115
    %v156 = vunpack.c.l.b16 %v116
    %v157 = vunpack.c.l.b16 %v117
    %v158 = vunpack.c.l.b16 %v118
    %v159 = vunpack.c.l.b16 %v119
    %v160 = vunpack.c.l.b16 %v120
    %v161 = vunpack.c.l.b16 %v121
    %v162 = vunpack.c.l.b16 %v122
    %v163 = vunpack.c.l.b16 %v123
    %v164 = vunpack.c.l.b16 %v124
    %v165 = vunpack.c.l.b16 %v125
    %v166 = vunpack.c.l.b16 %v126
    %v167 = vpack.c.b16 %v152, %v151
    %v168 = vpack.c.b16 %v154, %v153
    %v169 = vpack.c.b16 %v156, %v155
    %v170 = vpack.c.b16 %v158, %v157
    %v171 = vpack.c.b16 %v160, %v159
    %v172 = vpack.c.b16 %v162, %v161
    %v173 = vpack.c.b16 %v164, %v163
    %v174 = vpack.c.b16 %v166, %v165
    %183 = vmatprep.subr.bf16.mxu0 0
    %184 = vmatpush1.bf16.msra.mxu0 %v174
    %185 = vmatprep.subr.bf16.mxu0 0
    %186 = vmatpush1.bf16.msra.mxu0 %v173
    %187 = vmatprep.subr.bf16.mxu0 0
    %188 = vmatpush1.bf16.msra.mxu0 %v172
    %189 = vmatprep.subr.bf16.mxu0 0
    %190 = vmatpush1.bf16.msra.mxu0 %v171
    %191 = vmatprep.subr.bf16.mxu0 0
    %192 = vmatpush1.bf16.msra.mxu0 %v170
    %193 = vmatprep.subr.bf16.mxu0 0
    %194 = vmatpush1.bf16.msra.mxu0 %v169
    %195 = vmatprep.subr.bf16.mxu0 0
    %196 = vmatpush1.bf16.msra.mxu0 %v168
    %197 = vmatprep.subr.bf16.mxu0 0
    %198 = vmatpush1.bf16.msra.mxu0 %v167
    %199 = vmatprep.subr.bf16.mxu0 0
    %200 = vmatpush2.bf16.msra.mxu0 0
    %201 = vmatprep.subr.bf16.mxu0 0
    %202 = vmatpush2.bf16.msra.mxu0 0
    %203 = vmatprep.subr.bf16.mxu0 0
    %204 = vmatpush2.bf16.msra.mxu0 0
    %205 = vmatprep.subr.bf16.mxu0 0
    %206 = vmatpush2.bf16.msra.mxu0 0
    %207 = vmatprep.subr.bf16.mxu0 0
    %208 = vmatpush2.bf16.msra.mxu0 0
    %209 = vmatprep.subr.bf16.mxu0 0
    %210 = vmatpush2.bf16.msra.mxu0 0
    %211 = vmatprep.subr.bf16.mxu0 0
    %212 = vmatpush2.bf16.msra.mxu0 0
    %213 = vmatprep.subr.bf16.mxu0 0
    %214 = vmatpush2.bf16.msra.mxu0 0
    %215 = vmatprep.mubr.bf16.mxu0 0
    %216 = vmatmul.mubr.bf16.gmra.mxu0 %v128
    %v217 = vpop.f32.mrf.mxu0
    %v218 = vadd.f32 %v133, %v217
    %v219 = vpop.f32.mrf.mxu0
    %v220 = vpop.f32.mrf.mxu0
    %v221 = vpop.f32.mrf.mxu0
    %222 = vdwg.mxu0
    %v223 = vmax.f32 %v218, 0.0
    %v224 = vld [vmem:[%s5] sm:$0xf]
    %v225 = vld [vmem:[%s5 + $0x4] sm:$0xf]
    %v226 = vld [vmem:[%s5 + $0x8] sm:$0xf]
    %v227 = vld [vmem:[%s5 + $0xc] sm:$0xf]
    %v228 = vld [vmem:[%s5 + $0x10] sm:$0xf]
    %v229 = vld [vmem:[%s5 + $0x14] sm:$0xf]
    %v230 = vld [vmem:[%s5 + $0x18] sm:$0xf]
    %v231 = vld [vmem:[%s5 + $0x1c] sm:$0xf]
    %v232 = vld [vmem:[%s5 + $0x20] sm:$0xf]
    %v233 = vld [vmem:[%s5 + $0x24] sm:$0xf]
    %v234 = vld [vmem:[%s5 + $0x28] sm:$0xf]
    %v235 = vld [vmem:[%s5 + $0x2c] sm:$0xf]
    %v236 = vld [vmem:[%s5 + $0x30] sm:$0xf]
    %v237 = vld [vmem:[%s5 + $0x34] sm:$0xf]
    %v238 = vld [vmem:[%s5 + $0x38] sm:$0xf]
    %v239 = vld [vmem:[%s5 + $0x3c] sm:$0xf]
    %v240 = vld [vmem:[%s6] sm:$0x1]
    %v241 = vpack.c.bf16 %v223, %v223
    %v243 = vlaneseq
    %v244 = vshrl.u32 %v243, 7
    %v245 = vsub.s32 0, %v244
    %v246 = vrot.slane %v240, %v245
    %v264 = vunpack.c.l.b16 %v224
    %v265 = vunpack.c.l.b16 %v225
    %v266 = vunpack.c.l.b16 %v226
    %v267 = vunpack.c.l.b16 %v227
    %v268 = vunpack.c.l.b16 %v228
    %v269 = vunpack.c.l.b16 %v229
    %v270 = vunpack.c.l.b16 %v230
    %v271 = vunpack.c.l.b16 %v231
    %v272 = vunpack.c.l.b16 %v232
    %v273 = vunpack.c.l.b16 %v233
    %v274 = vunpack.c.l.b16 %v234
    %v275 = vunpack.c.l.b16 %v235
    %v276 = vunpack.c.l.b16 %v236
    %v277 = vunpack.c.l.b16 %v237
    %v278 = vunpack.c.l.b16 %v238
    %v279 = vunpack.c.l.b16 %v239
    %v280 = vpack.c.b16 %v265, %v264
    %v281 = vpack.c.b16 %v267, %v266
    %v282 = vpack.c.b16 %v269, %v268
    %v283 = vpack.c.b16 %v271, %v270
    %v284 = vpack.c.b16 %v273, %v272
    %v285 = vpack.c.b16 %v275, %v274
    %v286 = vpack.c.b16 %v277, %v276
    %v287 = vpack.c.b16 %v279, %v278
    %296 = vmatprep.subr.bf16.mxu0 0
    %297 = vmatpush1.bf16.msra.mxu0 %v287
    %298 = vmatprep.subr.bf16.mxu0 0
    %299 = vmatpush1.bf16.msra.mxu0 %v286
    %300 = vmatprep.subr.bf16.mxu0 0
    %301 = vmatpush1.bf16.msra.mxu0 %v285
    %302 = vmatprep.subr.bf16.mxu0 0
    %303 = vmatpush1.bf16.msra.mxu0 %v284
    %304 = vmatprep.subr.bf16.mxu0 0
    %305 = vmatpush1.bf16.msra.mxu0 %v283
    %306 = vmatprep.subr.bf16.mxu0 0
    %307 = vmatpush1.bf16.msra.mxu0 %v282
    %308 = vmatprep.subr.bf16.mxu0 0
    %309 = vmatpush1.bf16.msra.mxu0 %v281
    %310 = vmatprep.subr.bf16.mxu0 0
    %311 = vmatpush1.bf16.msra.mxu0 %v280
    %312 = vmatprep.subr.bf16.mxu0 0
    %313 = vmatpush2.bf16.msra.mxu0 0
    %314 = vmatprep.subr.bf16.mxu0 0
    %315 = vmatpush2.bf16.msra.mxu0 0
    %316 = vmatprep.subr.bf16.mxu0 0
    %317 = vmatpush2.bf16.msra.mxu0 0
    %318 = vmatprep.subr.bf16.mxu0 0
    %319 = vmatpush2.bf16.msra.mxu0 0
    %320 = vmatprep.subr.bf16.mxu0 0
    %321 = vmatpush2.bf16.msra.mxu0 0
    %322 = vmatprep.subr.bf16.mxu0 0
    %323 = vmatpush2.bf16.msra.mxu0 0
    %324 = vmatprep.subr.bf16.mxu0 0
    %325 = vmatpush2.bf16.msra.mxu0 0
    %326 = vmatprep.subr.bf16.mxu0 0
    %327 = vmatpush2.bf16.msra.mxu0 0
    %328 = vmatprep.mubr.bf16.mxu0 0
    %329 = vmatmul.mubr.bf16.gmra.mxu0 %v241
    %v330 = vpop.f32.mrf.mxu0
    %v331 = vadd.f32 %v246, %v330
    %v332 = vpop.f32.mrf.mxu0
    %v333 = vpop.f32.mrf.mxu0
    %v334 = vpop.f32.mrf.mxu0
    %335 = vdwg.mxu0
    %vm336 = vcmask 74752
    %v337 = vsel %vm336, %v331, -inf
    %338 = vmax.xlane.f32.xlu0 %v337
    %v339 = vpop.xlane.xlu0 %338
    %v340 = vsub.f32 %v331, %v339
    %v341 = vmul.f32 %v340, 1.442695
    %v342 = vpow.pop %v341
    %v343 = vsel %vm336, %v342, 0.0
    %344 = vadd.xlane.f32.xlu0 %v343
    %v345 = vpop.xlane.xlu0 %344
    %v346 = vlog2.pop %v345
    %v347 = vmul.f32 %v346, 0.6931472
    %v348 = vsub.f32 %v340, %v347
    %349 = vst.msk [vmem:[#allocation5] sm:$0x3] %vm336, %v348
    // Predicated region
    $region34: #{tpu_custom_call.1} parent=1 // pred_check
      _
    $region35: #{tpu_custom_call.1} parent=1 // pred_check_branch
      %351 = sbr.rel (0) target = $region37
    $region36: #{tpu_custom_call.1} parent=1 // pred_region
      %s353 = ssub.s32 32, 32
      %354 = vsyncadd [#allocation4], %s353
      %s356 = sshll.u32 [#allocation5], 4
      %s357 = int_to_ptr.vmem [resolvable:$true] %s356
      %359 = dma.vmem_to_hbm [thread:$0]  %s357, 32, %s7, [#allocation4]
    $region37: #{tpu_custom_call.1} parent=1 // pred_fallthru
      _
    // Predicated region
    $region38: #{tpu_custom_call.1} parent=1 // pred_check
      _
    $region39: #{tpu_custom_call.1} parent=1 // pred_check_branch
      %361 = sbr.rel (0) target = $region41
    $region40: #{tpu_custom_call.1} parent=1 // pred_region
      %362 = dma.done [#allocation4], 32
    $region41: #{tpu_custom_call.1} parent=1 // pred_fallthru
      _
    %363 = vsyncpa [#allocation3], 1
    %364 = vsyncpa [#allocation4], 1

</llo_original>
